<compile_context>
chip_gen: v6e
topology: v6e:2x2x1
jax: 0.10.0
libtpu: 0.0.40
codegen_flags: <defaults>
</compile_context>

<pallas_src>
import functools
import math

import jax
import jax.numpy as jnp
from jax.experimental import pallas as pl
from jax.experimental.pallas import tpu as pltpu

_LANE = 128        # TPU lane width (last-dim vreg granularity)
_BATCH_ALIGN = 16  # bf16 packs two rows per sublane -> keep batch tiles 16-aligned
_NEG_BIG = -1e30   # bias for padded action lanes -> exp underflows to exactly 0


def _round_up(x, m):
    return (x + m - 1) // m * m


# ----------------------------------------------------------------------------
# Kernel: one (TB, ·) batch tile of softmax(relu(relu(x@W1+b1)@W2+b2)@W3+b3)
# ----------------------------------------------------------------------------
def actor_kernel(x_ref, w1_ref, b1_ref, w2_ref, b2_ref, w3_ref, b3_ref, out_ref):
    # Cast to bf16 inside the kernel (rides a spare VPU slot); the wrapper
    # streams raw f32 state with no pre-processing pass.
    x = x_ref[...].astype(w1_ref.dtype)                       # (TB, S) bf16

    # fc1 + ReLU (MXU, f32 accumulate; elementwise stays f32)
    h1 = jnp.dot(x, w1_ref[...], preferred_element_type=jnp.float32) + b1_ref[...]
    h1 = jnp.maximum(h1, 0.0)

    # fc2 + ReLU
    h2 = jnp.dot(h1.astype(w2_ref.dtype), w2_ref[...],
                 preferred_element_type=jnp.float32) + b2_ref[...]
    h2 = jnp.maximum(h2, 0.0)

    # pi + softmax(dim=-1). Padded action lanes carry a -1e30 bias, so their
    # exp() is exactly 0 and they contribute nothing to the denominator.
    logits = jnp.dot(h2.astype(w3_ref.dtype), w3_ref[...],
                     preferred_element_type=jnp.float32) + b3_ref[...]
    m = jnp.max(logits, axis=-1, keepdims=True)
    e = jnp.exp(logits - m)
    probs = e / jnp.sum(e, axis=-1, keepdims=True)            # exact softmax

    # Store only the real action columns -> ~16x less HBM write traffic.
    a = out_ref.shape[-1]
    out_ref[...] = probs[:, :a].astype(out_ref.dtype)


# ----------------------------------------------------------------------------
# Parameter packing: pad to lane-dense layout, cast MXU operands to bf16
# ----------------------------------------------------------------------------
def pack_actor_params(params, mxu_dtype=jnp.bfloat16):
    """Pad hidden 64 -> 128 and action_dims -> multiple of 128.

    Padded lanes are mathematically inert: zero weights and zero hidden bias
    give relu(0)=0 hidden activations, and a -1e30 bias on padded action
    lanes gives them exactly zero softmax mass."""
    w1, b1, w2, b2, w3, b3 = params
    s_dims, hidden = w1.shape
    a_dims = w3.shape[1]
    hp = _round_up(hidden, _LANE)
    ap = _round_up(a_dims, _LANE)

    w1p = jnp.zeros((s_dims, hp), jnp.float32).at[:, :hidden].set(w1)
    b1p = jnp.zeros((1, hp), jnp.float32).at[:, :hidden].set(b1.reshape(1, -1))
    w2p = jnp.zeros((hp, hp), jnp.float32).at[:hidden, :hidden].set(w2)
    b2p = jnp.zeros((1, hp), jnp.float32).at[:, :hidden].set(b2.reshape(1, -1))
    w3p = jnp.zeros((hp, ap), jnp.float32).at[:hidden, :a_dims].set(w3)
    b3p = jnp.full((1, ap), _NEG_BIG, jnp.float32).at[:, :a_dims].set(
        b3.reshape(1, -1))

    packed = (w1p.astype(mxu_dtype), b1p,
              w2p.astype(mxu_dtype), b2p,
              w3p.astype(mxu_dtype), b3p)
    return packed, a_dims


# ----------------------------------------------------------------------------
# Wrapper: batch grid, resident weights, parallel semantics, cost estimate
# ----------------------------------------------------------------------------
@functools.partial(jax.jit,
                   static_argnames=("action_dims", "block_batch",
                                    "vmem_limit_bytes"))
def actor_forward(state, packed_params, *, action_dims, block_batch=2048,
                  vmem_limit_bytes=None):
    """state: (B, state_dims) f32 -> action probabilities (B, action_dims) f32."""
    assert block_batch % _BATCH_ALIGN == 0
    w1, b1, w2, b2, w3, b3 = packed_params
    B, S = state.shape
    hp = w1.shape[1]
    ap = w3.shape[1]

    # Batch tile: big enough to amortize the ~0.35us per-step pipeline overhead,
    # but capped so large batches produce >=2 grid steps (v7x megacore) and
    # small batches stay a single step. Always a multiple of 16 (bf16 rows).
    tb = min(block_batch, max(256, _round_up(pl.cdiv(B, 2), _BATCH_ALIGN)))
    tb = min(tb, _round_up(B, _BATCH_ALIGN))
    grid = (pl.cdiv(B, tb),)        # ragged final tile handled by Pallas masking

    # Grid-invariant weights/biases: constant index_map -> DMA'd once, resident.
    wspec = lambda shape: pl.BlockSpec(shape, lambda i: (0, 0))

    n_rows = grid[0] * tb
    flops = 2 * n_rows * (S * hp + hp * hp + hp * ap)
    transcendentals = n_rows * ap
    bytes_accessed = (B * S * 4
                      + sum(a.size * a.dtype.itemsize for a in packed_params)
                      + B * action_dims * 4)

    return pl.pallas_call(
        actor_kernel,
        out_shape=jax.ShapeDtypeStruct((B, action_dims), jnp.float32),
        grid=grid,
        in_specs=[
            pl.BlockSpec((tb, S), lambda i: (i, 0)),   # pipelined f32 state tile
            wspec(w1.shape), wspec(b1.shape),
            wspec(w2.shape), wspec(b2.shape),
            wspec(w3.shape), wspec(b3.shape),
        ],
        # Un-padded output: last block dim == full array dim (legal), 16x fewer
        # output bytes than a 128-lane padded f32 store.
        out_specs=pl.BlockSpec((tb, action_dims), lambda i: (i, 0)),
        compiler_params=pltpu.CompilerParams(
            dimension_semantics=("parallel",),
            vmem_limit_bytes=vmem_limit_bytes),
        cost_estimate=pl.CostEstimate(
            flops=flops,
            transcendentals=transcendentals,
            bytes_accessed=bytes_accessed),
    )(state, w1, b1, w2, b2, w3, b3)


# ----------------------------------------------------------------------------
# PyTorch-style initialization (uniform +/- 1/sqrt(fan_in)), unpadded layout
# ----------------------------------------------------------------------------
def init_actor_params(key, state_dims, action_dims, hidden=64):
    ks = jax.random.split(key, 6)

    def linear(kw, kb, fan_in, fan_out):
        bound = 1.0 / math.sqrt(fan_in)
        w = jax.random.uniform(kw, (fan_in, fan_out), jnp.float32, -bound, bound)
        b = jax.random.uniform(kb, (fan_out,), jnp.float32, -bound, bound)
        return w, b

    w1, b1 = linear(ks[0], ks[1], state_dims, hidden)
    w2, b2 = linear(ks[2], ks[3], hidden, hidden)
    w3, b3 = linear(ks[4], ks[5], hidden, action_dims)
    return (w1, b1, w2, b2, w3, b3)


# ----------------------------------------------------------------------------
# References
# ----------------------------------------------------------------------------
def ref_forward_f32(x, params):
    w1, b1, w2, b2, w3, b3 = params
    h1 = jnp.maximum(x @ w1 + b1, 0.0)
    h2 = jnp.maximum(h1 @ w2 + b2, 0.0)
    return jax.nn.softmax(h2 @ w3 + b3, axis=-1)


def ref_forward_mxu(x, params, mxu_dtype):
    """Same math as the kernel's dtype policy: bf16 MXU inputs, f32 elsewhere."""
    w1, b1, w2, b2, w3, b3 = params
    d = lambda a, b: jnp.dot(a.astype(mxu_dtype), b.astype(mxu_dtype),
                             preferred_element_type=jnp.float32)
    h1 = jnp.maximum(d(x, w1) + b1, 0.0)
    h2 = jnp.maximum(d(h1, w2) + b2, 0.0)
    return jax.nn.softmax(d(h2, w3) + b3, axis=-1)


if __name__ == "__main__":
    key = jax.random.PRNGKey(0)
    k_params, k_state = jax.random.split(key)

    batch = 50          # not a multiple of the tile -> exercises partial tiles
    state_dims = 16
    action_dims = 8

    params = init_actor_params(k_params, state_dims, action_dims)
    packed, _ = pack_actor_params(params, mxu_dtype=jnp.bfloat16)
    state = jax.random.normal(k_state, (batch, state_dims), dtype=jnp.float32)

    probs = actor_forward(state, packed, action_dims=action_dims)
    probs = jax.block_until_ready(probs)

    # Shape + probability sanity (exact division -> sums to 1 within f32 eps).
    assert probs.shape == (batch, action_dims)
    assert jnp.allclose(jnp.sum(probs, axis=-1), 1.0, atol=1e-3)

    # Tight check vs a reference using the same bf16-MXU/f32-elementwise policy.
    assert jnp.allclose(probs, ref_forward_mxu(state, params, jnp.bfloat16),
                        atol=5e-3)
    # Looser check vs the exact f32 PyTorch-equivalent math.
    assert jnp.allclose(probs, ref_forward_f32(state, params), atol=5e-2)

    # Multi-step grid + ragged final tile path (masked output stores, 2 TCs).
    batch2 = 600
    state2 = jax.random.normal(jax.random.PRNGKey(1), (batch2, state_dims),
                               dtype=jnp.float32)
    probs2 = jax.block_until_ready(
        actor_forward(state2, packed, action_dims=action_dims, block_batch=256))
    assert probs2.shape == (batch2, action_dims)
    assert jnp.allclose(jnp.sum(probs2, axis=-1), 1.0, atol=1e-3)
    assert jnp.allclose(probs2, ref_forward_mxu(state2, params, jnp.bfloat16),
                        atol=5e-3)

    print("KERNEL_OK")
</pallas_src>

<mosaic_0001>
module attributes {stable_mosaic.version = 11 : i64} {
  func.func @actor_kernel(%arg0: i32, %arg1: memref<64x16xf32, #tpu.memory_space<vmem>>, %arg2: memref<16x128xbf16, #tpu.memory_space<vmem>>, %arg3: memref<1x128xf32, #tpu.memory_space<vmem>>, %arg4: memref<128x128xbf16, #tpu.memory_space<vmem>>, %arg5: memref<1x128xf32, #tpu.memory_space<vmem>>, %arg6: memref<128x128xbf16, #tpu.memory_space<vmem>>, %arg7: memref<1x128xf32, #tpu.memory_space<vmem>>, %arg8: memref<64x8xf32, #tpu.memory_space<vmem>>) attributes {dimension_semantics = [#tpu.dimension_semantics<parallel>], iteration_bounds = array<i64: 1>, scalar_prefetch = 0 : i64, scratch_operands = 0 : i64, tpu.core_type = #tpu.core_type<tc>, window_params = [{transform_indices = @transform_0, window_bounds = array<i64: 64, 16>}, {pipeline_mode = #tpu.pipeline_mode<synchronous>, transform_indices = @transform_1, window_bounds = array<i64: 16, 128>}, {pipeline_mode = #tpu.pipeline_mode<synchronous>, transform_indices = @transform_2, window_bounds = array<i64: 1, 128>}, {pipeline_mode = #tpu.pipeline_mode<synchronous>, transform_indices = @transform_3, window_bounds = array<i64: 128, 128>}, {pipeline_mode = #tpu.pipeline_mode<synchronous>, transform_indices = @transform_4, window_bounds = array<i64: 1, 128>}, {pipeline_mode = #tpu.pipeline_mode<synchronous>, transform_indices = @transform_5, window_bounds = array<i64: 128, 128>}, {pipeline_mode = #tpu.pipeline_mode<synchronous>, transform_indices = @transform_6, window_bounds = array<i64: 1, 128>}, {transform_indices = @transform_7, window_bounds = array<i64: 64, 8>}]} {
    %c0 = arith.constant 0 : index
    %c0_0 = arith.constant 0 : index
    %0 = vector.load %arg1[%c0, %c0_0] : memref<64x16xf32, #tpu.memory_space<vmem>>, vector<64x16xf32>
    %1 = arith.truncf %0 : vector<64x16xf32> to vector<64x16xbf16>
    %c0_1 = arith.constant 0 : index
    %c0_2 = arith.constant 0 : index
    %2 = vector.load %arg2[%c0_1, %c0_2] : memref<16x128xbf16, #tpu.memory_space<vmem>>, vector<16x128xbf16>
    %cst = arith.constant dense<0.000000e+00> : vector<64x128xf32>
    %3 = tpu.matmul %1, %2, %cst {dimension_numbers = #tpu.dot_dimension_numbers<[1], [0], [0], [1], [0, 0, 1, 1], [], []>} : vector<64x16xbf16>, vector<16x128xbf16>, vector<64x128xf32> -> vector<64x128xf32>
    %c0_3 = arith.constant 0 : index
    %c0_4 = arith.constant 0 : index
    %4 = vector.load %arg3[%c0_3, %c0_4] : memref<1x128xf32, #tpu.memory_space<vmem>>, vector<1x128xf32>
    %5 = vector.broadcast %4 : vector<1x128xf32> to vector<64x128xf32>
    %6 = arith.addf %3, %5 : vector<64x128xf32>
    %cst_5 = arith.constant 0.000000e+00 : f32
    %7 = vector.broadcast %cst_5 : f32 to vector<64x128xf32>
    %8 = arith.maximumf %6, %7 : vector<64x128xf32>
    %9 = arith.truncf %8 : vector<64x128xf32> to vector<64x128xbf16>
    %c0_6 = arith.constant 0 : index
    %c0_7 = arith.constant 0 : index
    %10 = vector.load %arg4[%c0_6, %c0_7] : memref<128x128xbf16, #tpu.memory_space<vmem>>, vector<128x128xbf16>
    %cst_8 = arith.constant dense<0.000000e+00> : vector<64x128xf32>
    %11 = tpu.matmul %9, %10, %cst_8 {dimension_numbers = #tpu.dot_dimension_numbers<[1], [0], [0], [1], [0, 0, 1, 1], [], []>} : vector<64x128xbf16>, vector<128x128xbf16>, vector<64x128xf32> -> vector<64x128xf32>
    %c0_9 = arith.constant 0 : index
    %c0_10 = arith.constant 0 : index
    %12 = vector.load %arg5[%c0_9, %c0_10] : memref<1x128xf32, #tpu.memory_space<vmem>>, vector<1x128xf32>
    %13 = vector.broadcast %12 : vector<1x128xf32> to vector<64x128xf32>
    %14 = arith.addf %11, %13 : vector<64x128xf32>
    %cst_11 = arith.constant 0.000000e+00 : f32
    %15 = vector.broadcast %cst_11 : f32 to vector<64x128xf32>
    %16 = arith.maximumf %14, %15 : vector<64x128xf32>
    %17 = arith.truncf %16 : vector<64x128xf32> to vector<64x128xbf16>
    %c0_12 = arith.constant 0 : index
    %c0_13 = arith.constant 0 : index
    %18 = vector.load %arg6[%c0_12, %c0_13] : memref<128x128xbf16, #tpu.memory_space<vmem>>, vector<128x128xbf16>
    %cst_14 = arith.constant dense<0.000000e+00> : vector<64x128xf32>
    %19 = tpu.matmul %17, %18, %cst_14 {dimension_numbers = #tpu.dot_dimension_numbers<[1], [0], [0], [1], [0, 0, 1, 1], [], []>} : vector<64x128xbf16>, vector<128x128xbf16>, vector<64x128xf32> -> vector<64x128xf32>
    %c0_15 = arith.constant 0 : index
    %c0_16 = arith.constant 0 : index
    %20 = vector.load %arg7[%c0_15, %c0_16] : memref<1x128xf32, #tpu.memory_space<vmem>>, vector<1x128xf32>
    %21 = vector.broadcast %20 : vector<1x128xf32> to vector<64x128xf32>
    %22 = arith.addf %19, %21 : vector<64x128xf32>
    %cst_17 = arith.constant dense<0xFF800000> : vector<64xf32>
    %23 = vector.multi_reduction <maximumf>, %22, %cst_17 [1] : vector<64x128xf32> to vector<64xf32>
    %24 = vector.shape_cast %23 : vector<64xf32> to vector<64x1xf32>
    %25 = vector.broadcast %24 : vector<64x1xf32> to vector<64x128xf32>
    %26 = arith.subf %22, %25 : vector<64x128xf32>
    %27 = math.exp %26 : vector<64x128xf32>
    %cst_18 = arith.constant dense<0.000000e+00> : vector<64xf32>
    %28 = vector.multi_reduction <add>, %27, %cst_18 [1] : vector<64x128xf32> to vector<64xf32>
    %29 = vector.shape_cast %28 : vector<64xf32> to vector<64x1xf32>
    %30 = vector.broadcast %29 : vector<64x1xf32> to vector<64x128xf32>
    %31 = arith.divf %27, %30 : vector<64x128xf32>
    %32 = vector.extract_strided_slice %31 {offsets = [0, 0], sizes = [64, 8], strides = [1, 1]} : vector<64x128xf32> to vector<64x8xf32>
    %c0_19 = arith.constant 0 : index
    %c0_20 = arith.constant 0 : index
    %33 = vector.load %arg8[%c0_19, %c0_20] : memref<64x8xf32, #tpu.memory_space<vmem>>, vector<64x8xf32>
    tpu.vector_store %arg8[%c0_19, %c0_20], %32 {strides = array<i32>} : memref<64x8xf32, #tpu.memory_space<vmem>>, vector<64x8xf32>,
    return
  }
  func.func @transform_0(%arg0: i32) -> (i32, i32) {
    %c0_i32 = arith.constant 0 : i32
    %c0_i32_0 = arith.constant 0 : i32
    return %arg0, %c0_i32 : i32, i32
  }
  func.func @transform_1(%arg0: i32) -> (i32, i32) {
    %c0_i32 = arith.constant 0 : i32
    %c0_i32_0 = arith.constant 0 : i32
    %c0_i32_1 = arith.constant 0 : i32
    return %c0_i32, %c0_i32_0 : i32, i32
  }
  func.func @transform_2(%arg0: i32) -> (i32, i32) {
    %c0_i32 = arith.constant 0 : i32
    %c0_i32_0 = arith.constant 0 : i32
    %c0_i32_1 = arith.constant 0 : i32
    return %c0_i32, %c0_i32_0 : i32, i32
  }
  func.func @transform_3(%arg0: i32) -> (i32, i32) {
    %c0_i32 = arith.constant 0 : i32
    %c0_i32_0 = arith.constant 0 : i32
    %c0_i32_1 = arith.constant 0 : i32
    return %c0_i32, %c0_i32_0 : i32, i32
  }
  func.func @transform_4(%arg0: i32) -> (i32, i32) {
    %c0_i32 = arith.constant 0 : i32
    %c0_i32_0 = arith.constant 0 : i32
    %c0_i32_1 = arith.constant 0 : i32
    return %c0_i32, %c0_i32_0 : i32, i32
  }
  func.func @transform_5(%arg0: i32) -> (i32, i32) {
    %c0_i32 = arith.constant 0 : i32
    %c0_i32_0 = arith.constant 0 : i32
    %c0_i32_1 = arith.constant 0 : i32
    return %c0_i32, %c0_i32_0 : i32, i32
  }
  func.func @transform_6(%arg0: i32) -> (i32, i32) {
    %c0_i32 = arith.constant 0 : i32
    %c0_i32_0 = arith.constant 0 : i32
    %c0_i32_1 = arith.constant 0 : i32
    return %c0_i32, %c0_i32_0 : i32, i32
  }
  func.func @transform_7(%arg0: i32) -> (i32, i32) {
    %c0_i32 = arith.constant 0 : i32
    %c0_i32_0 = arith.constant 0 : i32
    return %arg0, %c0_i32 : i32, i32
  }
}

</mosaic_0001>

<llo_original>
// kernel: actor_forward.1
$region0: #{actor_forward.1}
  #allocation0 [shape = 'u32[]', space=smem, size = 0x4, offset = 0x4, fixed_abs, tag = 'smem constant byte address 0x4 - core index']
  #allocation1 [shape = 'u32[144,128]{1,0:T(1,128)}', space=vmem, size = 0x12000, scoped, tag = 'internal scratch']
  %s0 = inlined_call_operand.vmem [shape: f32[50,16], index: 0, kind: input, shape index: {}]
  %s1 = inlined_call_operand.vmem [shape: bf16[16,128], index: 1, kind: input, shape index: {}]
  %s2 = inlined_call_operand.vmem [shape: f32[1,128], index: 2, kind: input, shape index: {}]
  %s3 = inlined_call_operand.vmem [shape: bf16[128,128], index: 3, kind: input, shape index: {}]
  %s4 = inlined_call_operand.vmem [shape: f32[1,128], index: 4, kind: input, shape index: {}]
  %s5 = inlined_call_operand.hbm [shape: bf16[128,128], index: 5, kind: input, shape index: {}]
  %s6 = inlined_call_operand.vmem [shape: f32[1,128], index: 6, kind: input, shape index: {}]
  %s7 = inlined_call_operand.vmem [shape: f32[50,8], index: 7, kind: output, shape index: {}]
  %s8 = sld [smem:[#allocation0]]
  $region76: #{actor_forward.1} parent=0
    _
  %s10 = ssub.s32 1, %s8
  %s11 = scalar_select 0, %s10, %s8
  $region1: #{actor_forward.1} parent=0
    #allocation2 [shape = 'u8[32768]{0}', space=vmem, size = 0x8000, scoped, tag = 'input window, operand 5, single buffered']
    #allocation3 [shape = 's32[1]{0}', space=sflag, size = 0x4, scoped, tag = 'scoped memory for actor_forward.1']
    #allocation4 [shape = 'u8[32768]{0}', space=vmem, size = 0x8000, scoped, tag = 'output window, operand 0, single buffered']
    %12 = vsyncpa [#allocation3], 0
    // Predicated region
    $region2: #{actor_forward.1} parent=1 // pred_check
      _
    $region3: #{actor_forward.1} parent=1 // pred_check_branch
      %14 = sbr.rel (0) target = $region5
    $region4: #{actor_forward.1} parent=1 // pred_region
      _
    $region5: #{actor_forward.1} parent=1 // pred_fallthru
      _
    // Predicated region
    $region6: #{actor_forward.1} parent=1 // pred_check
      _
    $region7: #{actor_forward.1} parent=1 // pred_check_branch
      %16 = sbr.rel (0) target = $region9
    $region8: #{actor_forward.1} parent=1 // pred_region
      _
    $region9: #{actor_forward.1} parent=1 // pred_fallthru
      _
    // Predicated region
    $region10: #{actor_forward.1} parent=1 // pred_check
      _
    $region11: #{actor_forward.1} parent=1 // pred_check_branch
      %18 = sbr.rel (0) target = $region13
    $region12: #{actor_forward.1} parent=1 // pred_region
      _
    $region13: #{actor_forward.1} parent=1 // pred_fallthru
      _
    // Predicated region
    $region14: #{actor_forward.1} parent=1 // pred_check
      _
    $region15: #{actor_forward.1} parent=1 // pred_check_branch
      %20 = sbr.rel (0) target = $region17
    $region16: #{actor_forward.1} parent=1 // pred_region
      _
    $region17: #{actor_forward.1} parent=1 // pred_fallthru
      _
    // Predicated region
    $region18: #{actor_forward.1} parent=1 // pred_check
      _
    $region19: #{actor_forward.1} parent=1 // pred_check_branch
      %22 = sbr.rel (0) target = $region21
    $region20: #{actor_forward.1} parent=1 // pred_region
      _
    $region21: #{actor_forward.1} parent=1 // pred_fallthru
      _
    // Predicated region
    $region22: #{actor_forward.1} parent=1 // pred_check
      _
    $region23: #{actor_forward.1} parent=1 // pred_check_branch
      %24 = sbr.rel (0) target = $region25
    $region24: #{actor_forward.1} parent=1 // pred_region
      %s26 = ssub.s32 1024, 1024
      %27 = vsyncadd [#allocation3], %s26
      %s28 = sshll.u32 [#allocation2], 4
      %s29 = int_to_ptr.vmem [resolvable:$true] %s28
      %34 = dma.hbm_to_vmem [thread:$0]  %s5, 1024, %s29, [#allocation3], 64, 64, 4
    $region25: #{actor_forward.1} parent=1 // pred_fallthru
      _
    // Predicated region
    $region26: #{actor_forward.1} parent=1 // pred_check
      _
    $region27: #{actor_forward.1} parent=1 // pred_check_branch
      %36 = sbr.rel (0) target = $region29
    $region28: #{actor_forward.1} parent=1 // pred_region
      _
    $region29: #{actor_forward.1} parent=1 // pred_fallthru
      _
    // Predicated region
    $region30: #{actor_forward.1} parent=1 // pred_check
      _
    $region31: #{actor_forward.1} parent=1 // pred_check_branch
      %38 = sbr.rel (0) target = $region33
    $region32: #{actor_forward.1} parent=1 // pred_region
      %39 = dma.done [#allocation3], 1024
    $region33: #{actor_forward.1} parent=1 // pred_fallthru
      _
    %v41 = vld [vmem:[%s0] sm:$0xff]
    %v42 = vld [vmem:[%s0 + $0x8] sm:$0xff]
    %v43 = vld [vmem:[%s0 + $0x10] sm:$0xff]
    %v44 = vld [vmem:[%s0 + $0x18] sm:$0xff]
    %v45 = vld [vmem:[%s0 + $0x20] sm:$0xff]
    %v46 = vld [vmem:[%s0 + $0x28] sm:$0xff]
    %v47 = vld [vmem:[%s0 + $0x30] sm:$0xff]
    %v48 = vld [vmem:[%s0 + $0x38] sm:$0xff]
    %v49 = vpack.c.bf16 %v42, %v41
    %v50 = vpack.c.bf16 %v44, %v43
    %v51 = vpack.c.bf16 %v46, %v45
    %v52 = vpack.c.bf16 %v48, %v47
    %v53 = vld [vmem:[%s1] sm:$0xf]
    %v54 = vld [vmem:[%s1 + $0x4] sm:$0xf]
    %v55 = vld [vmem:[%s2] sm:$0x1]
    %v57 = vlaneseq
    %v58 = vshrl.u32 %v57, 7
    %v59 = vsub.s32 0, %v58
    %v60 = vrot.slane %v55, %v59
    %v64 = vunpack.c.l.b16 %v53
    %v65 = vunpack.c.l.b16 %v54
    %v66 = vpack.c.b16 %v65, %v64
    %vm68 = vcmask 130048
    %v70 = vsel %vm68, %v49, 0
    %v73 = vsel %vm68, %v50, 0
    %v76 = vsel %vm68, %v51, 0
    %v79 = vsel %vm68, %v52, 0
    %81 = vmatprep.subr.bf16.mxu0 0
    %82 = vmatpush1.bf16.msra.mxu0 0
    %83 = vmatprep.subr.bf16.mxu0 0
    %84 = vmatpush1.bf16.msra.mxu0 0
    %85 = vmatprep.subr.bf16.mxu0 0
    %86 = vmatpush1.bf16.msra.mxu0 0
    %87 = vmatprep.subr.bf16.mxu0 0
    %88 = vmatpush1.bf16.msra.mxu0 0
    %89 = vmatprep.subr.bf16.mxu0 0
    %90 = vmatpush1.bf16.msra.mxu0 0
    %91 = vmatprep.subr.bf16.mxu0 0
    %92 = vmatpush1.bf16.msra.mxu0 0
    %93 = vmatprep.subr.bf16.mxu0 0
    %94 = vmatpush1.bf16.msra.mxu0 0
    %95 = vmatprep.subr.bf16.mxu0 0
    %96 = vmatpush1.bf16.msra.mxu0 %v66
    %97 = vmatprep.subr.bf16.mxu0 0
    %98 = vmatpush2.bf16.msra.mxu0 0
    %99 = vmatprep.subr.bf16.mxu0 0
    %100 = vmatpush2.bf16.msra.mxu0 0
    %101 = vmatprep.subr.bf16.mxu0 0
    %102 = vmatpush2.bf16.msra.mxu0 0
    %103 = vmatprep.subr.bf16.mxu0 0
    %104 = vmatpush2.bf16.msra.mxu0 0
    %105 = vmatprep.subr.bf16.mxu0 0
    %106 = vmatpush2.bf16.msra.mxu0 0
    %107 = vmatprep.subr.bf16.mxu0 0
    %108 = vmatpush2.bf16.msra.mxu0 0
    %109 = vmatprep.subr.bf16.mxu0 0
    %110 = vmatpush2.bf16.msra.mxu0 0
    %111 = vmatprep.subr.bf16.mxu0 0
    %112 = vmatpush2.bf16.msra.mxu0 0
    %113 = vmatprep.mubr.bf16.mxu0 0
    %114 = vmatmul.mubr.bf16.gmra.mxu0 %v70
    %v115 = vpop.f32.mrf.mxu0
    %v116 = vadd.f32 %v60, %v115
    %v117 = vpop.f32.mrf.mxu0
    %v118 = vpop.f32.mrf.mxu0
    %v119 = vadd.f32 %v60, %v118
    %v120 = vpop.f32.mrf.mxu0
    %121 = vmatprep.mubr.bf16.mxu0 0
    %122 = vmatmul.mubr.bf16.gmra.mxu0 %v73
    %v123 = vpop.f32.mrf.mxu0
    %v124 = vadd.f32 %v60, %v123
    %v125 = vpop.f32.mrf.mxu0
    %v126 = vpop.f32.mrf.mxu0
    %v127 = vadd.f32 %v60, %v126
    %v128 = vpop.f32.mrf.mxu0
    %129 = vmatprep.mubr.bf16.mxu0 0
    %130 = vmatmul.mubr.bf16.gmra.mxu0 %v76
    %v131 = vpop.f32.mrf.mxu0
    %v132 = vadd.f32 %v60, %v131
    %v133 = vpop.f32.mrf.mxu0
    %v134 = vpop.f32.mrf.mxu0
    %v135 = vadd.f32 %v60, %v134
    %v136 = vpop.f32.mrf.mxu0
    %137 = vmatprep.mubr.bf16.mxu0 0
    %138 = vmatmul.mubr.bf16.gmra.mxu0 %v79
    %v139 = vpop.f32.mrf.mxu0
    %v140 = vadd.f32 %v60, %v139
    %v141 = vpop.f32.mrf.mxu0
    %v142 = vpop.f32.mrf.mxu0
    %v143 = vadd.f32 %v60, %v142
    %v144 = vpop.f32.mrf.mxu0
    %145 = vdwg.mxu0
    %v146 = vmax.f32 %v116, 0.0
    %v147 = vmax.f32 %v119, 0.0
    %v148 = vmax.f32 %v124, 0.0
    %v149 = vmax.f32 %v127, 0.0
    %v150 = vmax.f32 %v132, 0.0
    %v151 = vmax.f32 %v135, 0.0
    %v152 = vmax.f32 %v140, 0.0
    %v153 = vmax.f32 %v143, 0.0
    %v154 = vpack.c.bf16 %v147, %v146
    %v155 = vpack.c.bf16 %v149, %v148
    %v156 = vpack.c.bf16 %v151, %v150
    %v157 = vpack.c.bf16 %v153, %v152
    %v158 = vld [vmem:[%s3] sm:$0xf]
    %v159 = vld [vmem:[%s3 + $0x4] sm:$0xf]
    %v160 = vld [vmem:[%s3 + $0x8] sm:$0xf]
    %v161 = vld [vmem:[%s3 + $0xc] sm:$0xf]
    %v162 = vld [vmem:[%s3 + $0x10] sm:$0xf]
    %v163 = vld [vmem:[%s3 + $0x14] sm:$0xf]
    %v164 = vld [vmem:[%s3 + $0x18] sm:$0xf]
    %v165 = vld [vmem:[%s3 + $0x1c] sm:$0xf]
    %v166 = vld [vmem:[%s3 + $0x20] sm:$0xf]
    %v167 = vld [vmem:[%s3 + $0x24] sm:$0xf]
    %v168 = vld [vmem:[%s3 + $0x28] sm:$0xf]
    %v169 = vld [vmem:[%s3 + $0x2c] sm:$0xf]
    %v170 = vld [vmem:[%s3 + $0x30] sm:$0xf]
    %v171 = vld [vmem:[%s3 + $0x34] sm:$0xf]
    %v172 = vld [vmem:[%s3 + $0x38] sm:$0xf]
    %v173 = vld [vmem:[%s3 + $0x3c] sm:$0xf]
    %v174 = vld [vmem:[%s4] sm:$0x1]
    %v176 = vlaneseq
    %v177 = vshrl.u32 %v176, 7
    %v178 = vsub.s32 0, %v177
    %v179 = vrot.slane %v174, %v178
    %v197 = vunpack.c.l.b16 %v158
    %v198 = vunpack.c.l.b16 %v159
    %v199 = vunpack.c.l.b16 %v160
    %v200 = vunpack.c.l.b16 %v161
    %v201 = vunpack.c.l.b16 %v162
    %v202 = vunpack.c.l.b16 %v163
    %v203 = vunpack.c.l.b16 %v164
    %v204 = vunpack.c.l.b16 %v165
    %v205 = vunpack.c.l.b16 %v166
    %v206 = vunpack.c.l.b16 %v167
    %v207 = vunpack.c.l.b16 %v168
    %v208 = vunpack.c.l.b16 %v169
    %v209 = vunpack.c.l.b16 %v170
    %v210 = vunpack.c.l.b16 %v171
    %v211 = vunpack.c.l.b16 %v172
    %v212 = vunpack.c.l.b16 %v173
    %v213 = vpack.c.b16 %v198, %v197
    %v214 = vpack.c.b16 %v200, %v199
    %v215 = vpack.c.b16 %v202, %v201
    %v216 = vpack.c.b16 %v204, %v203
    %v217 = vpack.c.b16 %v206, %v205
    %v218 = vpack.c.b16 %v208, %v207
    %v219 = vpack.c.b16 %v210, %v209
    %v220 = vpack.c.b16 %v212, %v211
    %229 = vmatprep.subr.bf16.mxu0 0
    %230 = vmatpush1.bf16.msra.mxu0 %v220
    %231 = vmatprep.subr.bf16.mxu0 0
    %232 = vmatpush1.bf16.msra.mxu0 %v219
    %233 = vmatprep.subr.bf16.mxu0 0
    %234 = vmatpush1.bf16.msra.mxu0 %v218
    %235 = vmatprep.subr.bf16.mxu0 0
    %236 = vmatpush1.bf16.msra.mxu0 %v217
    %237 = vmatprep.subr.bf16.mxu0 0
    %238 = vmatpush1.bf16.msra.mxu0 %v216
    %239 = vmatprep.subr.bf16.mxu0 0
    %240 = vmatpush1.bf16.msra.mxu0 %v215
    %241 = vmatprep.subr.bf16.mxu0 0
    %242 = vmatpush1.bf16.msra.mxu0 %v214
    %243 = vmatprep.subr.bf16.mxu0 0
    %244 = vmatpush1.bf16.msra.mxu0 %v213
    %245 = vmatprep.subr.bf16.mxu0 0
    %246 = vmatpush2.bf16.msra.mxu0 0
    %247 = vmatprep.subr.bf16.mxu0 0
    %248 = vmatpush2.bf16.msra.mxu0 0
    %249 = vmatprep.subr.bf16.mxu0 0
    %250 = vmatpush2.bf16.msra.mxu0 0
    %251 = vmatprep.subr.bf16.mxu0 0
    %252 = vmatpush2.bf16.msra.mxu0 0
    %253 = vmatprep.subr.bf16.mxu0 0
    %254 = vmatpush2.bf16.msra.mxu0 0
    %255 = vmatprep.subr.bf16.mxu0 0
    %256 = vmatpush2.bf16.msra.mxu0 0
    %257 = vmatprep.subr.bf16.mxu0 0
    %258 = vmatpush2.bf16.msra.mxu0 0
    %259 = vmatprep.subr.bf16.mxu0 0
    %260 = vmatpush2.bf16.msra.mxu0 0
    %261 = vmatprep.mubr.bf16.mxu0 0
    %262 = vmatmul.mubr.bf16.gmra.mxu0 %v154
    %v263 = vpop.f32.mrf.mxu0
    %v264 = vadd.f32 %v179, %v263
    %v265 = vpop.f32.mrf.mxu0
    %v266 = vpop.f32.mrf.mxu0
    %v267 = vadd.f32 %v179, %v266
    %v268 = vpop.f32.mrf.mxu0
    %269 = vmatprep.mubr.bf16.mxu0 0
    %270 = vmatmul.mubr.bf16.gmra.mxu0 %v155
    %v271 = vpop.f32.mrf.mxu0
    %v272 = vadd.f32 %v179, %v271
    %v273 = vpop.f32.mrf.mxu0
    %v274 = vpop.f32.mrf.mxu0
    %v275 = vadd.f32 %v179, %v274
    %v276 = vpop.f32.mrf.mxu0
    %277 = vmatprep.mubr.bf16.mxu0 0
    %278 = vmatmul.mubr.bf16.gmra.mxu0 %v156
    %v279 = vpop.f32.mrf.mxu0
    %v280 = vadd.f32 %v179, %v279
    %v281 = vpop.f32.mrf.mxu0
    %v282 = vpop.f32.mrf.mxu0
    %v283 = vadd.f32 %v179, %v282
    %v284 = vpop.f32.mrf.mxu0
    %285 = vmatprep.mubr.bf16.mxu0 0
    %286 = vmatmul.mubr.bf16.gmra.mxu0 %v157
    %v287 = vpop.f32.mrf.mxu0
    %v288 = vadd.f32 %v179, %v287
    %v289 = vpop.f32.mrf.mxu0
    %v290 = vpop.f32.mrf.mxu0
    %v291 = vadd.f32 %v179, %v290
    %v292 = vpop.f32.mrf.mxu0
    %293 = vdwg.mxu0
    %v294 = vmax.f32 %v264, 0.0
    %v295 = vmax.f32 %v267, 0.0
    %v296 = vmax.f32 %v272, 0.0
    %v297 = vmax.f32 %v275, 0.0
    %v298 = vmax.f32 %v280, 0.0
    %v299 = vmax.f32 %v283, 0.0
    %v300 = vmax.f32 %v288, 0.0
    %v301 = vmax.f32 %v291, 0.0
    %v302 = vpack.c.bf16 %v295, %v294
    %v303 = vpack.c.bf16 %v297, %v296
    %v304 = vpack.c.bf16 %v299, %v298
    %v305 = vpack.c.bf16 %v301, %v300
    %v306 = vld [vmem:[#allocation2] sm:$0xf]
    %v307 = vld [vmem:[#allocation2 + $0x4] sm:$0xf]
    %v308 = vld [vmem:[#allocation2 + $0x8] sm:$0xf]
    %v309 = vld [vmem:[#allocation2 + $0xc] sm:$0xf]
    %v310 = vld [vmem:[#allocation2 + $0x10] sm:$0xf]
    %v311 = vld [vmem:[#allocation2 + $0x14] sm:$0xf]
    %v312 = vld [vmem:[#allocation2 + $0x18] sm:$0xf]
    %v313 = vld [vmem:[#allocation2 + $0x1c] sm:$0xf]
    %v314 = vld [vmem:[#allocation2 + $0x20] sm:$0xf]
    %v315 = vld [vmem:[#allocation2 + $0x24] sm:$0xf]
    %v316 = vld [vmem:[#allocation2 + $0x28] sm:$0xf]
    %v317 = vld [vmem:[#allocation2 + $0x2c] sm:$0xf]
    %v318 = vld [vmem:[#allocation2 + $0x30] sm:$0xf]
    %v319 = vld [vmem:[#allocation2 + $0x34] sm:$0xf]
    %v320 = vld [vmem:[#allocation2 + $0x38] sm:$0xf]
    %v321 = vld [vmem:[#allocation2 + $0x3c] sm:$0xf]
    %v322 = vld [vmem:[%s6] sm:$0x1]
    %v324 = vlaneseq
    %v325 = vshrl.u32 %v324, 7
    %v326 = vsub.s32 0, %v325
    %v327 = vrot.slane %v322, %v326
    %v345 = vunpack.c.l.b16 %v306
    %v346 = vunpack.c.l.b16 %v307
    %v347 = vunpack.c.l.b16 %v308
    %v348 = vunpack.c.l.b16 %v309
    %v349 = vunpack.c.l.b16 %v310
    %v350 = vunpack.c.l.b16 %v311
    %v351 = vunpack.c.l.b16 %v312
    %v352 = vunpack.c.l.b16 %v313
    %v353 = vunpack.c.l.b16 %v314
    %v354 = vunpack.c.l.b16 %v315
    %v355 = vunpack.c.l.b16 %v316
    %v356 = vunpack.c.l.b16 %v317
    %v357 = vunpack.c.l.b16 %v318
    %v358 = vunpack.c.l.b16 %v319
    %v359 = vunpack.c.l.b16 %v320
    %v360 = vunpack.c.l.b16 %v321
    %v361 = vpack.c.b16 %v346, %v345
    %v362 = vpack.c.b16 %v348, %v347
    %v363 = vpack.c.b16 %v350, %v349
    %v364 = vpack.c.b16 %v352, %v351
    %v365 = vpack.c.b16 %v354, %v353
    %v366 = vpack.c.b16 %v356, %v355
    %v367 = vpack.c.b16 %v358, %v357
    %v368 = vpack.c.b16 %v360, %v359
    %377 = vmatprep.subr.bf16.mxu0 0
    %378 = vmatpush1.bf16.msra.mxu0 %v368
    %379 = vmatprep.subr.bf16.mxu0 0
    %380 = vmatpush1.bf16.msra.mxu0 %v367
    %381 = vmatprep.subr.bf16.mxu0 0
    %382 = vmatpush1.bf16.msra.mxu0 %v366
    %383 = vmatprep.subr.bf16.mxu0 0
    %384 = vmatpush1.bf16.msra.mxu0 %v365
    %385 = vmatprep.subr.bf16.mxu0 0
    %386 = vmatpush1.bf16.msra.mxu0 %v364
    %387 = vmatprep.subr.bf16.mxu0 0
    %388 = vmatpush1.bf16.msra.mxu0 %v363
    %389 = vmatprep.subr.bf16.mxu0 0
    %390 = vmatpush1.bf16.msra.mxu0 %v362
    %391 = vmatprep.subr.bf16.mxu0 0
    %392 = vmatpush1.bf16.msra.mxu0 %v361
    %393 = vmatprep.subr.bf16.mxu0 0
    %394 = vmatpush2.bf16.msra.mxu0 0
    %395 = vmatprep.subr.bf16.mxu0 0
    %396 = vmatpush2.bf16.msra.mxu0 0
    %397 = vmatprep.subr.bf16.mxu0 0
    %398 = vmatpush2.bf16.msra.mxu0 0
    %399 = vmatprep.subr.bf16.mxu0 0
    %400 = vmatpush2.bf16.msra.mxu0 0
    %401 = vmatprep.subr.bf16.mxu0 0
    %402 = vmatpush2.bf16.msra.mxu0 0
    %403 = vmatprep.subr.bf16.mxu0 0
    %404 = vmatpush2.bf16.msra.mxu0 0
    %405 = vmatprep.subr.bf16.mxu0 0
    %406 = vmatpush2.bf16.msra.mxu0 0
    %407 = vmatprep.subr.bf16.mxu0 0
    %408 = vmatpush2.bf16.msra.mxu0 0
    %409 = vmatprep.mubr.bf16.mxu0 0
    %410 = vmatmul.mubr.bf16.gmra.mxu0 %v302
    %v411 = vpop.f32.mrf.mxu0
    %v412 = vadd.f32 %v327, %v411
    %v413 = vpop.f32.mrf.mxu0
    %v414 = vpop.f32.mrf.mxu0
    %v415 = vadd.f32 %v327, %v414
    %v416 = vpop.f32.mrf.mxu0
    %417 = vmatprep.mubr.bf16.mxu0 0
    %418 = vmatmul.mubr.bf16.gmra.mxu0 %v303
    %v419 = vpop.f32.mrf.mxu0
    %v420 = vadd.f32 %v327, %v419
    %v421 = vpop.f32.mrf.mxu0
    %v422 = vpop.f32.mrf.mxu0
    %v423 = vadd.f32 %v327, %v422
    %v424 = vpop.f32.mrf.mxu0
    %425 = vmatprep.mubr.bf16.mxu0 0
    %426 = vmatmul.mubr.bf16.gmra.mxu0 %v304
    %v427 = vpop.f32.mrf.mxu0
    %v428 = vadd.f32 %v327, %v427
    %v429 = vpop.f32.mrf.mxu0
    %v430 = vpop.f32.mrf.mxu0
    %v431 = vadd.f32 %v327, %v430
    %v432 = vpop.f32.mrf.mxu0
    %433 = vmatprep.mubr.bf16.mxu0 0
    %434 = vmatmul.mubr.bf16.gmra.mxu0 %v305
    %v435 = vpop.f32.mrf.mxu0
    %v436 = vadd.f32 %v327, %v435
    %v437 = vpop.f32.mrf.mxu0
    %v438 = vpop.f32.mrf.mxu0
    %v439 = vadd.f32 %v327, %v438
    %v440 = vpop.f32.mrf.mxu0
    %441 = vdwg.mxu0
    %442 = vmax.xlane.f32.xlu0 %v412
    %v443 = vpop.xlane.xlu0 %442
    %444 = vmax.xlane.f32.xlu0 %v415
    %v445 = vpop.xlane.xlu0 %444
    %446 = vmax.xlane.f32.xlu0 %v420
    %v447 = vpop.xlane.xlu0 %446
    %448 = vmax.xlane.f32.xlu0 %v423
    %v449 = vpop.xlane.xlu0 %448
    %450 = vmax.xlane.f32.xlu0 %v428
    %v451 = vpop.xlane.xlu0 %450
    %452 = vmax.xlane.f32.xlu0 %v431
    %v453 = vpop.xlane.xlu0 %452
    %454 = vmax.xlane.f32.xlu0 %v436
    %v455 = vpop.xlane.xlu0 %454
    %456 = vmax.xlane.f32.xlu0 %v439
    %v457 = vpop.xlane.xlu0 %456
    %v458 = vsub.f32 %v412, %v443
    %v459 = vsub.f32 %v415, %v445
    %v460 = vsub.f32 %v420, %v447
    %v461 = vsub.f32 %v423, %v449
    %v462 = vsub.f32 %v428, %v451
    %v463 = vsub.f32 %v431, %v453
    %v464 = vsub.f32 %v436, %v455
    %v465 = vsub.f32 %v439, %v457
    %v466 = vmul.f32 %v458, 1.442695
    %v467 = vpow.pop %v466
    %v468 = vmul.f32 %v459, 1.442695
    %v469 = vpow.pop %v468
    %v470 = vmul.f32 %v460, 1.442695
    %v471 = vpow.pop %v470
    %v472 = vmul.f32 %v461, 1.442695
    %v473 = vpow.pop %v472
    %v474 = vmul.f32 %v462, 1.442695
    %v475 = vpow.pop %v474
    %v476 = vmul.f32 %v463, 1.442695
    %v477 = vpow.pop %v476
    %v478 = vmul.f32 %v464, 1.442695
    %v479 = vpow.pop %v478
    %v480 = vmul.f32 %v465, 1.442695
    %v481 = vpow.pop %v480
    %482 = vadd.xlane.f32.xlu0 %v467
    %v483 = vpop.xlane.xlu0 %482
    %484 = vadd.xlane.f32.xlu0 %v469
    %v485 = vpop.xlane.xlu0 %484
    %486 = vadd.xlane.f32.xlu0 %v471
    %v487 = vpop.xlane.xlu0 %486
    %488 = vadd.xlane.f32.xlu0 %v473
    %v489 = vpop.xlane.xlu0 %488
    %490 = vadd.xlane.f32.xlu0 %v475
    %v491 = vpop.xlane.xlu0 %490
    %492 = vadd.xlane.f32.xlu0 %v477
    %v493 = vpop.xlane.xlu0 %492
    %494 = vadd.xlane.f32.xlu0 %v479
    %v495 = vpop.xlane.xlu0 %494
    %496 = vadd.xlane.f32.xlu0 %v481
    %v497 = vpop.xlane.xlu0 %496
    %v498 = vrcp.pop %v483
    %v499 = vmul.f32 %v467, %v498
    %v500 = vrcp.pop %v485
    %v501 = vmul.f32 %v469, %v500
    %v502 = vrcp.pop %v487
    %v503 = vmul.f32 %v471, %v502
    %v504 = vrcp.pop %v489
    %v505 = vmul.f32 %v473, %v504
    %v506 = vrcp.pop %v491
    %v507 = vmul.f32 %v475, %v506
    %v508 = vrcp.pop %v493
    %v509 = vmul.f32 %v477, %v508
    %v510 = vrcp.pop %v495
    %v511 = vmul.f32 %v479, %v510
    %v512 = vrcp.pop %v497
    %v513 = vmul.f32 %v481, %v512
    %vm514 = vcmask 64512
    %515 = vst.msk [vmem:[#allocation4] sm:$0xff] %vm514, %v499
    %516 = vst.msk [vmem:[#allocation4 + $0x8] sm:$0xff] %vm514, %v501
    %517 = vst.msk [vmem:[#allocation4 + $0x10] sm:$0xff] %vm514, %v503
    %518 = vst.msk [vmem:[#allocation4 + $0x18] sm:$0xff] %vm514, %v505
    %519 = vst.msk [vmem:[#allocation4 + $0x20] sm:$0xff] %vm514, %v507
    %520 = vst.msk [vmem:[#allocation4 + $0x28] sm:$0xff] %vm514, %v509
    %521 = vst.msk [vmem:[#allocation4 + $0x30] sm:$0xff] %vm514, %v511
    %522 = vst.msk [vmem:[#allocation4 + $0x38] sm:$0xff] %vm514, %v513
    // Predicated region
    $region34: #{actor_forward.1} parent=1 // pred_check
      _
    $region35: #{actor_forward.1} parent=1 // pred_check_branch
      %524 = sbr.rel (0) target = $region37
    $region36: #{actor_forward.1} parent=1 // pred_region
      // Predicated region
      $region38: #{actor_forward.1} parent=36 // pred_check
        _
      $region39: #{actor_forward.1} parent=36 // pred_check_branch
        %526 = sbr.rel (0) target = $region41
      $region40: #{actor_forward.1} parent=36 // pred_region
        // Predicated region
        $region42: #{actor_forward.1} parent=40 // pred_check
          _
        $region43: #{actor_forward.1} parent=40 // pred_check_branch
          %528 = sbr.rel (0) target = $region45
        $region44: #{actor_forward.1} parent=40 // pred_region
          // Predicated region
          $region57: #{actor_forward.1} parent=44 // pred_check
            _
          $region58: #{actor_forward.1} parent=44 // pred_check_branch
            %556 = sbr.rel (0) target = $region60
          $region59: #{actor_forward.1} parent=44 // pred_region
            loop: start=0, step=1, limit=1
            $region61: #{actor_forward.1} parent=59 // loop_pre_header
              _
            $region62: #{actor_forward.1} parent=59 // loop_header
              %s558 = sphi 0, %s562
              %p559 = scmp.ge.s32.totalorder %s558, 1
              %s563 = sphi [#allocation4], [#allocation4]
              %s564 = sphi %s7, %s7
            $region63: #{actor_forward.1} parent=59 // loop_header_branch
              %561 = sbr.rel (%p559) target = $region67
            $region64: #{actor_forward.1} parent=59 // loop_body
              %v565 = vld [vmem:[%s563] sm:$0xff]
              %566 = vst [vmem:[%s564] sm:$0xff] %v565
              %v567 = vld [vmem:[%s563 + $0x8] sm:$0xff]
              %568 = vst [vmem:[%s564 + $0x8] sm:$0xff] %v567
              %v569 = vld [vmem:[%s563 + $0x10] sm:$0xff]
              %570 = vst [vmem:[%s564 + $0x10] sm:$0xff] %v569
              %v571 = vld [vmem:[%s563 + $0x18] sm:$0xff]
              %572 = vst [vmem:[%s564 + $0x18] sm:$0xff] %v571
              %v573 = vld [vmem:[%s563 + $0x20] sm:$0xff]
              %574 = vst [vmem:[%s564 + $0x20] sm:$0xff] %v573
              %v575 = vld [vmem:[%s563 + $0x28] sm:$0xff]
              %576 = vst [vmem:[%s564 + $0x28] sm:$0xff] %v575
              %v577 = vld [vmem:[%s563 + $0x30] sm:$0xff]
              %578 = vst [vmem:[%s564 + $0x30] sm:$0xff] %v577
            $region65: #{actor_forward.1} parent=59 // loop_footer
              %s562 = sadd.s32 1, %s558
            $region66: #{actor_forward.1} parent=59 // loop_footer_branch
              %557 = sbr.rel target = $region62
            $region67: #{actor_forward.1} parent=59 // loop_exit
              _
          $region60: #{actor_forward.1} parent=44 // pred_fallthru
            _
          // Predicated region
          $region68: #{actor_forward.1} parent=44 // pred_check
            _
          $region69: #{actor_forward.1} parent=44 // pred_check_branch
            %580 = sbr.rel target = $region71
          $region70: #{actor_forward.1} parent=44 // pred_region
            _
          $region71: #{actor_forward.1} parent=44 // pred_fallthru
            _
        $region45: #{actor_forward.1} parent=40 // pred_fallthru
          _
        // Predicated region
        $region46: #{actor_forward.1} parent=40 // pred_check
          _
        $region47: #{actor_forward.1} parent=40 // pred_check_branch
          %530 = sbr.rel target = $region49
        $region48: #{actor_forward.1} parent=40 // pred_region
          %s532 = ssub.s32 256, 1
          loop: start=0, step=1, limit=1
          $region50: #{actor_forward.1} parent=48 // loop_pre_header
            _
          $region51: #{actor_forward.1} parent=48 // loop_header
            %s534 = sphi 0, %s538
            %p535 = scmp.ge.s32.totalorder %s534, 1
            %s539 = sphi [#allocation4], [#allocation4]
            %s540 = sphi %s7, %s7
          $region52: #{actor_forward.1} parent=48 // loop_header_branch
            %537 = sbr.rel (%p535) target = $region56
          $region53: #{actor_forward.1} parent=48 // loop_body
            %v541 = vld [vmem:[%s539] sm:%s532]
            %542 = vst [vmem:[%s540] sm:%s532] %v541
            %v543 = vld [vmem:[%s539 + $0x8] sm:%s532]
            %544 = vst [vmem:[%s540 + $0x8] sm:%s532] %v543
            %v545 = vld [vmem:[%s539 + $0x10] sm:%s532]
            %546 = vst [vmem:[%s540 + $0x10] sm:%s532] %v545
            %v547 = vld [vmem:[%s539 + $0x18] sm:%s532]
            %548 = vst [vmem:[%s540 + $0x18] sm:%s532] %v547
            %v549 = vld [vmem:[%s539 + $0x20] sm:%s532]
            %550 = vst [vmem:[%s540 + $0x20] sm:%s532] %v549
            %v551 = vld [vmem:[%s539 + $0x28] sm:%s532]
            %552 = vst [vmem:[%s540 + $0x28] sm:%s532] %v551
            %v553 = vld [vmem:[%s539 + $0x30] sm:%s532]
            %554 = vst [vmem:[%s540 + $0x30] sm:%s532] %v553
          $region54: #{actor_forward.1} parent=48 // loop_footer
            %s538 = sadd.s32 1, %s534
          $region55: #{actor_forward.1} parent=48 // loop_footer_branch
            %533 = sbr.rel target = $region51
          $region56: #{actor_forward.1} parent=48 // loop_exit
            _
        $region49: #{actor_forward.1} parent=40 // pred_fallthru
          _
      $region41: #{actor_forward.1} parent=36 // pred_fallthru
        _
      %581 = vnop
    $region37: #{actor_forward.1} parent=1 // pred_fallthru
      _
    // Predicated region
    $region72: #{actor_forward.1} parent=1 // pred_check
      _
    $region73: #{actor_forward.1} parent=1 // pred_check_branch
      %583 = sbr.rel (0) target = $region75
    $region74: #{actor_forward.1} parent=1 // pred_region
      _
    $region75: #{actor_forward.1} parent=1 // pred_fallthru
      _
    %584 = vsyncpa [#allocation3], 1

</llo_original>
